<compile_context>
chip_gen: v5e
topology: v5e:2x2
jax: 0.10.0
libtpu: 0.0.40
codegen_flags: <defaults>
</compile_context>

<pallas_src>
import functools

import jax
import jax.numpy as jnp
from jax.experimental import pallas as pl
from jax.experimental.pallas import tpu as pltpu


def _negr_kernel(x_ref, y_ref, r_ref,
                 sx_ref, sy_ref, sxx_ref, syy_ref, sxy_ref,
                 cx_ref, cy_ref,
                 *, n_total, n_pad):
    nb = pl.program_id(1)  # reduction (N) axis, innermost

    x = x_ref[...].astype(jnp.float32)
    y = y_ref[...].astype(jnp.float32)

    @pl.when(nb == 0)
    def _init():
        # Per-column shift = first data row (numerical stabilizer for the
        # one-pass moment formula); zero the vreg-shaped accumulators.
        cx_ref[...] = x[0:1, :]
        cy_ref[...] = y[0:1, :]
        sx_ref[...] = jnp.zeros_like(sx_ref)
        sy_ref[...] = jnp.zeros_like(sy_ref)
        sxx_ref[...] = jnp.zeros_like(sxx_ref)
        syy_ref[...] = jnp.zeros_like(syy_ref)
        sxy_ref[...] = jnp.zeros_like(sxy_ref)

    u = x - cx_ref[...]
    v = y - cy_ref[...]

    bn, bd = u.shape
    # Split the sublane axis into groups of 8 (lane axis untouched): the
    # per-step partial sums stay (8, block_d) so accumulator loads/stores are
    # full unmasked vregs and no XLU cross-sublane reduce runs per step.
    u3 = u.reshape(bn // 8, 8, bd)
    v3 = v.reshape(bn // 8, 8, bd)

    sx_ref[...] += jnp.sum(u3, axis=0)
    sy_ref[...] += jnp.sum(v3, axis=0)
    sxx_ref[...] += jnp.sum(u3 * u3, axis=0)
    syy_ref[...] += jnp.sum(v3 * v3, axis=0)
    sxy_ref[...] += jnp.sum(u3 * v3, axis=0)

    @pl.when(nb == pl.num_programs(1) - 1)
    def _finalize():
        # Single cross-sublane collapse of the (8, block_d) accumulators.
        su = jnp.sum(sx_ref[...], axis=0, keepdims=True)
        sv = jnp.sum(sy_ref[...], axis=0, keepdims=True)
        suu = jnp.sum(sxx_ref[...], axis=0, keepdims=True)
        svv = jnp.sum(syy_ref[...], axis=0, keepdims=True)
        suv = jnp.sum(sxy_ref[...], axis=0, keepdims=True)
        if n_pad:
            # Zero-padded rows contributed (0 - c) terms; remove them exactly.
            cx = cx_ref[...]
            cy = cy_ref[...]
            npad = jnp.float32(n_pad)
            su = su + npad * cx
            sv = sv + npad * cy
            suu = suu - npad * cx * cx
            svv = svv - npad * cy * cy
            suv = suv - npad * cx * cy
        inv_n = jnp.float32(1.0 / n_total)
        mu = su * inv_n
        mv = sv * inv_n
        ssxm = suu * inv_n - mu * mu      # var(x) (shift-invariant)
        ssym = svv * inv_n - mv * mv
        ssxym = suv * inv_n - mu * mv     # cov(x, y)
        # r = cov / sqrt(varx * vary); rsqrt routes to the EUP slot.
        # No eps, matching the original forward (zero-variance -> inf/nan).
        r = ssxym * jax.lax.rsqrt(ssxm * ssym)
        r_ref[...] = r.astype(r_ref.dtype)


def _round_up(v, m):
    return -(-v // m) * m


@functools.lru_cache(maxsize=1)
def _tpu_config():
    """(dual_core, input working-set budget, vmem_limit cap) per generation."""
    try:
        vmem_bytes = int(pltpu.get_tpu_info().vmem_capacity_bytes)
    except Exception:
        # Unknown generation: no D split, v7x-safe VMEM budget.
        return False, 24 << 20, 48 << 20
    if vmem_bytes <= (96 << 20):          # v7x: 64 MiB per TensorCore, 2 TCs
        return True, 24 << 20, 48 << 20
    return False, 48 << 20, 96 << 20      # v5e/v6e: 128 MiB, single TC


def _pick_block_d(d_work, itemsize, pack, budget_bytes, dual_core):
    """Lane-axis tile.

    Single-TC (v5e/v6e): full-D rows -> fully contiguous per-step input DMA.
    Dual-TC (v7x): exactly 2 "parallel" D blocks when the halves stay
    128-aligned and strided DMA rows stay >= ~1 KiB; otherwise full D.
    """
    if dual_core and d_work % 256 == 0 and (d_work // 2) * itemsize >= 1024:
        bd = d_work // 2
    else:
        bd = d_work
    # Shrink further only if even the minimal N tile would blow the budget.
    if d_work % 128 == 0:
        while bd > 128 and 4 * pack * bd * itemsize > budget_bytes:
            cands = [c for c in range(128, bd, 128) if d_work % c == 0]
            if not cands:
                break
            bd = max(cands)
    return bd


def _pick_block_n(n, block_d, itemsize, pack, budget_bytes, block_n_cap=None):
    """Sublane-axis tile: ~4 MiB of input per operand per grid step, capped by
    the double-buffered (2 inputs x 2 buffers) VMEM budget; pack-aligned."""
    max_bn = max(pack, (budget_bytes // (4 * block_d * itemsize)) // pack * pack)
    target = max(pack, _round_up((4 << 20) // (block_d * itemsize), pack))
    bn = min(target, max_bn, _round_up(n, pack))
    if block_n_cap is not None:
        bn = min(bn, max(pack, block_n_cap // pack * pack))
    return max(pack, bn // pack * pack)


@functools.partial(jax.jit, static_argnames=("block_n_cap",))
def negr_loss(x, y, block_n_cap=None):
    """Pearson r per feature column, reduced over axis 0 (NegRLoss.forward).

    Matches torch: r = cov(x, y) / sqrt(var(x) * var(y)) per column, shape
    [D]; no negation, no eps (the original forward applies neither).
    `block_n_cap` is a test-only knob to force multi-block N streaming.
    """
    assert x.shape == y.shape and x.ndim == 2, "expected x, y of shape [N, D]"
    n, d = x.shape
    itemsize = jnp.dtype(x.dtype).itemsize
    pack = {2: 16, 1: 32}.get(itemsize, 8)  # native sublane packing per dtype

    dual_core, budget_bytes, vmem_cap = _tpu_config()

    # Feature (lane) axis: pad to a 128 multiple only if it must be tiled;
    # small non-128 D uses a legal full-extent block instead.
    d_work = d if (d % 128 == 0 or d <= 512) else _round_up(d, 128)

    block_d = _pick_block_d(d_work, itemsize, pack, budget_bytes, dual_core)
    block_n = _pick_block_n(n, block_d, itemsize, pack, budget_bytes, block_n_cap)

    # Reduction axis: rebalance block_n so padding is minimal, then zero-pad N
    # up to a block multiple (padded rows are removed analytically in-kernel).
    n_blocks = -(-n // block_n)
    block_n = max(pack, _round_up(-(-n // n_blocks), pack))
    n_work = n_blocks * block_n
    n_pad = n_work - n
    if n_pad or d_work != d:
        x = jnp.pad(x, ((0, n_pad), (0, d_work - d)))
        y = jnp.pad(y, ((0, n_pad), (0, d_work - d)))

    grid = (d_work // block_d, n_blocks)  # reduction axis last

    working_set = 4 * block_n * block_d * itemsize  # 2 inputs x 2 buffers
    vmem_limit = int(min(vmem_cap, max(32 << 20, working_set + (8 << 20))))

    kernel = functools.partial(_negr_kernel, n_total=float(n), n_pad=int(n_pad))

    out = pl.pallas_call(
        kernel,
        out_shape=jax.ShapeDtypeStruct((1, d_work), jnp.float32),
        grid=grid,
        in_specs=[
            pl.BlockSpec((block_n, block_d), lambda j, k: (k, j)),
            pl.BlockSpec((block_n, block_d), lambda j, k: (k, j)),
        ],
        # Same output block across the N axis -> VMEM resident, written once
        # in the finalize step.
        out_specs=pl.BlockSpec((1, block_d), lambda j, k: (0, j)),
        scratch_shapes=[pltpu.VMEM((8, block_d), jnp.float32)] * 5
                     + [pltpu.VMEM((1, block_d), jnp.float32)] * 2,
        compiler_params=pltpu.CompilerParams(
            dimension_semantics=("parallel", "arbitrary"),
            vmem_limit_bytes=vmem_limit,
        ),
        cost_estimate=pl.CostEstimate(
            flops=int(12 * n * d),
            transcendentals=int(d),
            bytes_accessed=int(2 * n * d * itemsize + 4 * d),
        ),
    )(x, y)
    return out[0, :d]  # shape [D], same as the torch result


def _reference(x, y):
    x = x.astype(jnp.float32)
    y = y.astype(jnp.float32)
    xmean = jnp.mean(x, axis=0)
    ymean = jnp.mean(y, axis=0)
    ssxm = jnp.mean((x - xmean) ** 2, axis=0)
    ssym = jnp.mean((y - ymean) ** 2, axis=0)
    ssxym = jnp.mean((x - xmean) * (y - ymean), axis=0)
    return ssxym / jnp.sqrt(ssxm * ssym)


if __name__ == "__main__":
    # 1) Small shape matching the module's typical use (seq=8, hidden=32).
    kx, ky = jax.random.split(jax.random.PRNGKey(0))
    N, D = 8, 32
    x = jax.random.normal(kx, (N, D), dtype=jnp.float32)
    y = 0.5 * x + 0.5 * jax.random.normal(ky, (N, D), dtype=jnp.float32)
    r = jax.block_until_ready(negr_loss(x, y))
    assert r.shape == (D,)
    assert jnp.allclose(r, _reference(x, y), atol=1e-5, rtol=1e-5)

    # 2) Streamed accumulation path: multiple N blocks (block_n capped for
    #    the test) and a nonzero column mean to exercise the shifted moments.
    k1, k2 = jax.random.split(jax.random.PRNGKey(1))
    N2, D2 = 2048, 256
    x2 = jax.random.normal(k1, (N2, D2), dtype=jnp.float32) + 3.0
    y2 = 0.3 * x2 + 0.7 * jax.random.normal(k2, (N2, D2), dtype=jnp.float32)
    r2 = jax.block_until_ready(negr_loss(x2, y2, block_n_cap=512))
    r2_ref = _reference(x2, y2)
    assert r2.shape == (D2,)
    assert jnp.allclose(r2, r2_ref, atol=1e-4, rtol=1e-4), (
        float(jnp.max(jnp.abs(r2 - r2_ref))))

    # 3) Non-divisible N (zero-pad + analytic correction) and non-128 D.
    k3, k4 = jax.random.split(jax.random.PRNGKey(2))
    N3, D3 = 1003, 160
    x3 = jax.random.normal(k3, (N3, D3), dtype=jnp.float32)
    y3 = -0.4 * x3 + 0.6 * jax.random.normal(k4, (N3, D3), dtype=jnp.float32)
    r3 = jax.block_until_ready(negr_loss(x3, y3, block_n_cap=256))
    assert r3.shape == (D3,)
    assert jnp.allclose(r3, _reference(x3, y3), atol=1e-4, rtol=1e-4)

    # 4) bf16 inputs: 16-row sublane packing + padding path.
    k5, k6 = jax.random.split(jax.random.PRNGKey(3))
    N4, D4 = 24, 32
    x4 = jax.random.normal(k5, (N4, D4), dtype=jnp.bfloat16)
    y4 = (0.5 * x4.astype(jnp.float32)
          + 0.5 * jax.random.normal(k6, (N4, D4), dtype=jnp.float32)
          ).astype(jnp.bfloat16)
    r4 = jax.block_until_ready(negr_loss(x4, y4))
    assert r4.shape == (D4,)
    assert jnp.allclose(r4, _reference(x4, y4), atol=1e-3, rtol=1e-3)

    print("KERNEL_OK")
</pallas_src>

<mosaic_0001>
module attributes {stable_mosaic.version = 11 : i64} {
  func.func @_negr_kernel(%arg0: i32, %arg1: i32, %arg2: memref<8x32xf32, #tpu.memory_space<vmem>>, %arg3: memref<8x32xf32, #tpu.memory_space<vmem>>, %arg4: memref<1x32xf32, #tpu.memory_space<vmem>>, %arg5: memref<8x32xf32, #tpu.memory_space<vmem>>, %arg6: memref<8x32xf32, #tpu.memory_space<vmem>>, %arg7: memref<8x32xf32, #tpu.memory_space<vmem>>, %arg8: memref<8x32xf32, #tpu.memory_space<vmem>>, %arg9: memref<8x32xf32, #tpu.memory_space<vmem>>, %arg10: memref<1x32xf32, #tpu.memory_space<vmem>>, %arg11: memref<1x32xf32, #tpu.memory_space<vmem>>) attributes {dimension_semantics = [#tpu.dimension_semantics<parallel>, #tpu.dimension_semantics<arbitrary>], iteration_bounds = array<i64: 1, 1>, scalar_prefetch = 0 : i64, scratch_operands = 7 : i64, tpu.core_type = #tpu.core_type<tc>, window_params = [{transform_indices = @transform_0, window_bounds = array<i64: 8, 32>}, {transform_indices = @transform_1, window_bounds = array<i64: 8, 32>}, {transform_indices = @transform_2, window_bounds = array<i64: 1, 32>}]} {
    %c0 = arith.constant 0 : index
    %c0_0 = arith.constant 0 : index
    %0 = vector.load %arg2[%c0, %c0_0] : memref<8x32xf32, #tpu.memory_space<vmem>>, vector<8x32xf32>
    %c0_1 = arith.constant 0 : index
    %c0_2 = arith.constant 0 : index
    %1 = vector.load %arg3[%c0_1, %c0_2] : memref<8x32xf32, #tpu.memory_space<vmem>>, vector<8x32xf32>
    %c0_i32 = arith.constant 0 : i32
    %2 = arith.cmpi eq, %arg1, %c0_i32 : i32
    %3 = arith.extui %2 : i1 to i32
    %c0_i32_3 = arith.constant 0 : i32
    %4 = arith.cmpi ne, %3, %c0_i32_3 : i32
    scf.if %4 {
      %39 = vector.extract_strided_slice %0 {offsets = [0, 0], sizes = [1, 32], strides = [1, 1]} : vector<8x32xf32> to vector<1x32xf32>
      %c0_34 = arith.constant 0 : index
      %c0_35 = arith.constant 0 : index
      %40 = vector.load %arg10[%c0_34, %c0_35] : memref<1x32xf32, #tpu.memory_space<vmem>>, vector<1x32xf32>
      tpu.vector_store %arg10[%c0_34, %c0_35], %39 {strides = array<i32>} : memref<1x32xf32, #tpu.memory_space<vmem>>, vector<1x32xf32>,
      %41 = vector.extract_strided_slice %1 {offsets = [0, 0], sizes = [1, 32], strides = [1, 1]} : vector<8x32xf32> to vector<1x32xf32>
      %c0_36 = arith.constant 0 : index
      %c0_37 = arith.constant 0 : index
      %42 = vector.load %arg11[%c0_36, %c0_37] : memref<1x32xf32, #tpu.memory_space<vmem>>, vector<1x32xf32>
      tpu.vector_store %arg11[%c0_36, %c0_37], %41 {strides = array<i32>} : memref<1x32xf32, #tpu.memory_space<vmem>>, vector<1x32xf32>,
      %cst_38 = arith.constant 0.000000e+00 : f32
      %43 = vector.broadcast %cst_38 : f32 to vector<8x32xf32>
      %c0_39 = arith.constant 0 : index
      %c0_40 = arith.constant 0 : index
      %44 = vector.load %arg5[%c0_39, %c0_40] : memref<8x32xf32, #tpu.memory_space<vmem>>, vector<8x32xf32>
      tpu.vector_store %arg5[%c0_39, %c0_40], %43 {strides = array<i32>} : memref<8x32xf32, #tpu.memory_space<vmem>>, vector<8x32xf32>,
      %cst_41 = arith.constant 0.000000e+00 : f32
      %45 = vector.broadcast %cst_41 : f32 to vector<8x32xf32>
      %c0_42 = arith.constant 0 : index
      %c0_43 = arith.constant 0 : index
      %46 = vector.load %arg6[%c0_42, %c0_43] : memref<8x32xf32, #tpu.memory_space<vmem>>, vector<8x32xf32>
      tpu.vector_store %arg6[%c0_42, %c0_43], %45 {strides = array<i32>} : memref<8x32xf32, #tpu.memory_space<vmem>>, vector<8x32xf32>,
      %cst_44 = arith.constant 0.000000e+00 : f32
      %47 = vector.broadcast %cst_44 : f32 to vector<8x32xf32>
      %c0_45 = arith.constant 0 : index
      %c0_46 = arith.constant 0 : index
      %48 = vector.load %arg7[%c0_45, %c0_46] : memref<8x32xf32, #tpu.memory_space<vmem>>, vector<8x32xf32>
      tpu.vector_store %arg7[%c0_45, %c0_46], %47 {strides = array<i32>} : memref<8x32xf32, #tpu.memory_space<vmem>>, vector<8x32xf32>,
      %cst_47 = arith.constant 0.000000e+00 : f32
      %49 = vector.broadcast %cst_47 : f32 to vector<8x32xf32>
      %c0_48 = arith.constant 0 : index
      %c0_49 = arith.constant 0 : index
      %50 = vector.load %arg8[%c0_48, %c0_49] : memref<8x32xf32, #tpu.memory_space<vmem>>, vector<8x32xf32>
      tpu.vector_store %arg8[%c0_48, %c0_49], %49 {strides = array<i32>} : memref<8x32xf32, #tpu.memory_space<vmem>>, vector<8x32xf32>,
      %cst_50 = arith.constant 0.000000e+00 : f32
      %51 = vector.broadcast %cst_50 : f32 to vector<8x32xf32>
      %c0_51 = arith.constant 0 : index
      %c0_52 = arith.constant 0 : index
      %52 = vector.load %arg9[%c0_51, %c0_52] : memref<8x32xf32, #tpu.memory_space<vmem>>, vector<8x32xf32>
      tpu.vector_store %arg9[%c0_51, %c0_52], %51 {strides = array<i32>} : memref<8x32xf32, #tpu.memory_space<vmem>>, vector<8x32xf32>,
    } else {
    }
    %c0_4 = arith.constant 0 : index
    %c0_5 = arith.constant 0 : index
    %5 = vector.load %arg10[%c0_4, %c0_5] : memref<1x32xf32, #tpu.memory_space<vmem>>, vector<1x32xf32>
    %6 = vector.broadcast %5 : vector<1x32xf32> to vector<8x32xf32>
    %7 = arith.subf %0, %6 : vector<8x32xf32>
    %c0_6 = arith.constant 0 : index
    %c0_7 = arith.constant 0 : index
    %8 = vector.load %arg11[%c0_6, %c0_7] : memref<1x32xf32, #tpu.memory_space<vmem>>, vector<1x32xf32>
    %9 = vector.broadcast %8 : vector<1x32xf32> to vector<8x32xf32>
    %10 = arith.subf %1, %9 : vector<8x32xf32>
    %11 = vector.shape_cast %7 : vector<8x32xf32> to vector<1x8x32xf32>
    %12 = vector.shape_cast %10 : vector<8x32xf32> to vector<1x8x32xf32>
    %c0_8 = arith.constant 0 : index
    %c0_9 = arith.constant 0 : index
    %13 = vector.load %arg5[%c0_8, %c0_9] : memref<8x32xf32, #tpu.memory_space<vmem>>, vector<8x32xf32>
    %cst = arith.constant dense<0.000000e+00> : vector<8x32xf32>
    %14 = vector.multi_reduction <add>, %11, %cst [0] : vector<1x8x32xf32> to vector<8x32xf32>
    %15 = arith.addf %13, %14 : vector<8x32xf32>
    %c0_10 = arith.constant 0 : index
    %c0_11 = arith.constant 0 : index
    %16 = vector.load %arg5[%c0_10, %c0_11] : memref<8x32xf32, #tpu.memory_space<vmem>>, vector<8x32xf32>
    tpu.vector_store %arg5[%c0_10, %c0_11], %15 {strides = array<i32>} : memref<8x32xf32, #tpu.memory_space<vmem>>, vector<8x32xf32>,
    %c0_12 = arith.constant 0 : index
    %c0_13 = arith.constant 0 : index
    %17 = vector.load %arg6[%c0_12, %c0_13] : memref<8x32xf32, #tpu.memory_space<vmem>>, vector<8x32xf32>
    %cst_14 = arith.constant dense<0.000000e+00> : vector<8x32xf32>
    %18 = vector.multi_reduction <add>, %12, %cst_14 [0] : vector<1x8x32xf32> to vector<8x32xf32>
    %19 = arith.addf %17, %18 : vector<8x32xf32>
    %c0_15 = arith.constant 0 : index
    %c0_16 = arith.constant 0 : index
    %20 = vector.load %arg6[%c0_15, %c0_16] : memref<8x32xf32, #tpu.memory_space<vmem>>, vector<8x32xf32>
    tpu.vector_store %arg6[%c0_15, %c0_16], %19 {strides = array<i32>} : memref<8x32xf32, #tpu.memory_space<vmem>>, vector<8x32xf32>,
    %c0_17 = arith.constant 0 : index
    %c0_18 = arith.constant 0 : index
    %21 = vector.load %arg7[%c0_17, %c0_18] : memref<8x32xf32, #tpu.memory_space<vmem>>, vector<8x32xf32>
    %22 = arith.mulf %11, %11 : vector<1x8x32xf32>
    %cst_19 = arith.constant dense<0.000000e+00> : vector<8x32xf32>
    %23 = vector.multi_reduction <add>, %22, %cst_19 [0] : vector<1x8x32xf32> to vector<8x32xf32>
    %24 = arith.addf %21, %23 : vector<8x32xf32>
    %c0_20 = arith.constant 0 : index
    %c0_21 = arith.constant 0 : index
    %25 = vector.load %arg7[%c0_20, %c0_21] : memref<8x32xf32, #tpu.memory_space<vmem>>, vector<8x32xf32>
    tpu.vector_store %arg7[%c0_20, %c0_21], %24 {strides = array<i32>} : memref<8x32xf32, #tpu.memory_space<vmem>>, vector<8x32xf32>,
    %c0_22 = arith.constant 0 : index
    %c0_23 = arith.constant 0 : index
    %26 = vector.load %arg8[%c0_22, %c0_23] : memref<8x32xf32, #tpu.memory_space<vmem>>, vector<8x32xf32>
    %27 = arith.mulf %12, %12 : vector<1x8x32xf32>
    %cst_24 = arith.constant dense<0.000000e+00> : vector<8x32xf32>
    %28 = vector.multi_reduction <add>, %27, %cst_24 [0] : vector<1x8x32xf32> to vector<8x32xf32>
    %29 = arith.addf %26, %28 : vector<8x32xf32>
    %c0_25 = arith.constant 0 : index
    %c0_26 = arith.constant 0 : index
    %30 = vector.load %arg8[%c0_25, %c0_26] : memref<8x32xf32, #tpu.memory_space<vmem>>, vector<8x32xf32>
    tpu.vector_store %arg8[%c0_25, %c0_26], %29 {strides = array<i32>} : memref<8x32xf32, #tpu.memory_space<vmem>>, vector<8x32xf32>,
    %c0_27 = arith.constant 0 : index
    %c0_28 = arith.constant 0 : index
    %31 = vector.load %arg9[%c0_27, %c0_28] : memref<8x32xf32, #tpu.memory_space<vmem>>, vector<8x32xf32>
    %32 = arith.mulf %11, %12 : vector<1x8x32xf32>
    %cst_29 = arith.constant dense<0.000000e+00> : vector<8x32xf32>
    %33 = vector.multi_reduction <add>, %32, %cst_29 [0] : vector<1x8x32xf32> to vector<8x32xf32>
    %34 = arith.addf %31, %33 : vector<8x32xf32>
    %c0_30 = arith.constant 0 : index
    %c0_31 = arith.constant 0 : index
    %35 = vector.load %arg9[%c0_30, %c0_31] : memref<8x32xf32, #tpu.memory_space<vmem>>, vector<8x32xf32>
    tpu.vector_store %arg9[%c0_30, %c0_31], %34 {strides = array<i32>} : memref<8x32xf32, #tpu.memory_space<vmem>>, vector<8x32xf32>,
    %c0_i32_32 = arith.constant 0 : i32
    %36 = arith.cmpi eq, %arg1, %c0_i32_32 : i32
    %37 = arith.extui %36 : i1 to i32
    %c0_i32_33 = arith.constant 0 : i32
    %38 = arith.cmpi ne, %37, %c0_i32_33 : i32
    scf.if %38 {
      %c0_34 = arith.constant 0 : index
      %c0_35 = arith.constant 0 : index
      %39 = vector.load %arg5[%c0_34, %c0_35] : memref<8x32xf32, #tpu.memory_space<vmem>>, vector<8x32xf32>
      %cst_36 = arith.constant dense<0.000000e+00> : vector<32xf32>
      %40 = vector.multi_reduction <add>, %39, %cst_36 [0] : vector<8x32xf32> to vector<32xf32>
      %41 = vector.shape_cast %40 : vector<32xf32> to vector<1x32xf32>
      %c0_37 = arith.constant 0 : index
      %c0_38 = arith.constant 0 : index
      %42 = vector.load %arg6[%c0_37, %c0_38] : memref<8x32xf32, #tpu.memory_space<vmem>>, vector<8x32xf32>
      %cst_39 = arith.constant dense<0.000000e+00> : vector<32xf32>
      %43 = vector.multi_reduction <add>, %42, %cst_39 [0] : vector<8x32xf32> to vector<32xf32>
      %44 = vector.shape_cast %43 : vector<32xf32> to vector<1x32xf32>
      %c0_40 = arith.constant 0 : index
      %c0_41 = arith.constant 0 : index
      %45 = vector.load %arg7[%c0_40, %c0_41] : memref<8x32xf32, #tpu.memory_space<vmem>>, vector<8x32xf32>
      %cst_42 = arith.constant dense<0.000000e+00> : vector<32xf32>
      %46 = vector.multi_reduction <add>, %45, %cst_42 [0] : vector<8x32xf32> to vector<32xf32>
      %47 = vector.shape_cast %46 : vector<32xf32> to vector<1x32xf32>
      %c0_43 = arith.constant 0 : index
      %c0_44 = arith.constant 0 : index
      %48 = vector.load %arg8[%c0_43, %c0_44] : memref<8x32xf32, #tpu.memory_space<vmem>>, vector<8x32xf32>
      %cst_45 = arith.constant dense<0.000000e+00> : vector<32xf32>
      %49 = vector.multi_reduction <add>, %48, %cst_45 [0] : vector<8x32xf32> to vector<32xf32>
      %50 = vector.shape_cast %49 : vector<32xf32> to vector<1x32xf32>
      %c0_46 = arith.constant 0 : index
      %c0_47 = arith.constant 0 : index
      %51 = vector.load %arg9[%c0_46, %c0_47] : memref<8x32xf32, #tpu.memory_space<vmem>>, vector<8x32xf32>
      %cst_48 = arith.constant dense<0.000000e+00> : vector<32xf32>
      %52 = vector.multi_reduction <add>, %51, %cst_48 [0] : vector<8x32xf32> to vector<32xf32>
      %53 = vector.shape_cast %52 : vector<32xf32> to vector<1x32xf32>
      %cst_49 = arith.constant 1.250000e-01 : f32
      %54 = vector.broadcast %cst_49 : f32 to vector<1x32xf32>
      %55 = arith.mulf %41, %54 : vector<1x32xf32>
      %cst_50 = arith.constant 1.250000e-01 : f32
      %56 = vector.broadcast %cst_50 : f32 to vector<1x32xf32>
      %57 = arith.mulf %44, %56 : vector<1x32xf32>
      %cst_51 = arith.constant 1.250000e-01 : f32
      %58 = vector.broadcast %cst_51 : f32 to vector<1x32xf32>
      %59 = arith.mulf %47, %58 : vector<1x32xf32>
      %60 = arith.mulf %55, %55 : vector<1x32xf32>
      %61 = arith.subf %59, %60 : vector<1x32xf32>
      %cst_52 = arith.constant 1.250000e-01 : f32
      %62 = vector.broadcast %cst_52 : f32 to vector<1x32xf32>
      %63 = arith.mulf %50, %62 : vector<1x32xf32>
      %64 = arith.mulf %57, %57 : vector<1x32xf32>
      %65 = arith.subf %63, %64 : vector<1x32xf32>
      %cst_53 = arith.constant 1.250000e-01 : f32
      %66 = vector.broadcast %cst_53 : f32 to vector<1x32xf32>
      %67 = arith.mulf %53, %66 : vector<1x32xf32>
      %68 = arith.mulf %55, %57 : vector<1x32xf32>
      %69 = arith.subf %67, %68 : vector<1x32xf32>
      %70 = arith.mulf %61, %65 : vector<1x32xf32>
      %71 = math.rsqrt %70 : vector<1x32xf32>
      %72 = arith.mulf %69, %71 : vector<1x32xf32>
      %c0_54 = arith.constant 0 : index
      %c0_55 = arith.constant 0 : index
      %73 = vector.load %arg4[%c0_54, %c0_55] : memref<1x32xf32, #tpu.memory_space<vmem>>, vector<1x32xf32>
      tpu.vector_store %arg4[%c0_54, %c0_55], %72 {strides = array<i32>} : memref<1x32xf32, #tpu.memory_space<vmem>>, vector<1x32xf32>,
    } else {
    }
    return
  }
  func.func @transform_0(%arg0: i32, %arg1: i32) -> (i32, i32) {
    %c0_i32 = arith.constant 0 : i32
    return %arg1, %arg0 : i32, i32
  }
  func.func @transform_1(%arg0: i32, %arg1: i32) -> (i32, i32) {
    %c0_i32 = arith.constant 0 : i32
    return %arg1, %arg0 : i32, i32
  }
  func.func @transform_2(%arg0: i32, %arg1: i32) -> (i32, i32) {
    %c0_i32 = arith.constant 0 : i32
    %c0_i32_0 = arith.constant 0 : i32
    return %c0_i32, %arg0 : i32, i32
  }
}

</mosaic_0001>

<llo_original>
// kernel: negr_loss.1
$region0: #{negr_loss.1}
  #allocation0 [shape = 'u32[]', space=smem, size = 0x4, offset = 0x4, fixed_abs, tag = 'smem constant byte address 0x4 - core index']
  #allocation1 [shape = 'u32[72,128]{1,0:T(1,128)}', space=vmem, size = 0x9000, scoped, tag = 'internal scratch']
  #allocation2 [shape = 'f32[8,32]{1,0:T(8,128)}', space=vmem, size = 0x1000, scoped, tag = 'scratch operand']
  #allocation3 [shape = 'f32[8,32]{1,0:T(8,128)}', space=vmem, size = 0x1000, scoped, tag = 'scratch operand']
  #allocation4 [shape = 'f32[8,32]{1,0:T(8,128)}', space=vmem, size = 0x1000, scoped, tag = 'scratch operand']
  #allocation5 [shape = 'f32[8,32]{1,0:T(8,128)}', space=vmem, size = 0x1000, scoped, tag = 'scratch operand']
  #allocation6 [shape = 'f32[8,32]{1,0:T(8,128)}', space=vmem, size = 0x1000, scoped, tag = 'scratch operand']
  #allocation7 [shape = 'f32[1,32]{1,0:T(1,128)}', space=vmem, size = 0x200, scoped, tag = 'scratch operand']
  #allocation8 [shape = 'f32[1,32]{1,0:T(1,128)}', space=vmem, size = 0x200, scoped, tag = 'scratch operand']
  %s0 = inlined_call_operand.hbm [shape: f32[8,32], index: 0, kind: input, shape index: {}]
  %s1 = inlined_call_operand.hbm [shape: f32[8,32], index: 1, kind: input, shape index: {}]
  %s2 = inlined_call_operand.hbm [shape: f32[1,32], index: 2, kind: output, shape index: {}]
  %s3 = sld [smem:[#allocation0]]
  $region34: #{negr_loss.1} parent=0
    _
  %s5 = ssub.s32 1, %s3
  %s6 = scalar_select 0, %s5, %s3
  $region1: #{negr_loss.1} parent=0
    #allocation9 [shape = 'u8[4096]{0}', space=vmem, size = 0x1000, scoped, tag = 'input window, operand 0, single buffered']
    #allocation10 [shape = 's32[1]{0}', space=sflag, size = 0x4, scoped, tag = 'scoped memory for negr_loss.1']
    #allocation11 [shape = 's32[1]{0}', space=sflag, size = 0x4, scoped, tag = 'scoped memory for negr_loss.1']
    #allocation12 [shape = 'u8[4096]{0}', space=vmem, size = 0x1000, scoped, tag = 'input window, operand 1, single buffered']
    #allocation13 [shape = 's32[1]{0}', space=sflag, size = 0x4, scoped, tag = 'scoped memory for negr_loss.1']
    #allocation14 [shape = 'u8[512]{0}', space=vmem, size = 0x400, scoped, tag = 'output window, operand 0, single buffered']
    %7 = vsyncpa [#allocation10], 0
    %8 = vsyncpa [#allocation13], 0
    %9 = vsyncpa [#allocation11], 0
    // Predicated region
    $region2: #{negr_loss.1} parent=1 // pred_check
      _
    $region3: #{negr_loss.1} parent=1 // pred_check_branch
      %11 = sbr.rel (0) target = $region5
    $region4: #{negr_loss.1} parent=1 // pred_region
      %13 = vsyncadd [#allocation10], 0
      %s15 = sshll.u32 %s0, 4
      %s16 = int_to_ptr.hbm [resolvable:$true] %s15
      %s17 = sshll.u32 [#allocation9], 4
      %s18 = int_to_ptr.vmem [resolvable:$true] %s17
      %20 = dma.hbm_to_vmem [thread:$0]  %s16, 128, %s18, [#allocation10]
    $region5: #{negr_loss.1} parent=1 // pred_fallthru
      _
    // Predicated region
    $region6: #{negr_loss.1} parent=1 // pred_check
      _
    $region7: #{negr_loss.1} parent=1 // pred_check_branch
      %22 = sbr.rel (0) target = $region9
    $region8: #{negr_loss.1} parent=1 // pred_region
      %24 = vsyncadd [#allocation13], 0
      %s26 = sshll.u32 %s1, 4
      %s27 = int_to_ptr.hbm [resolvable:$true] %s26
      %s28 = sshll.u32 [#allocation12], 4
      %s29 = int_to_ptr.vmem [resolvable:$true] %s28
      %31 = dma.hbm_to_vmem [thread:$0]  %s27, 128, %s29, [#allocation13]
    $region9: #{negr_loss.1} parent=1 // pred_fallthru
      _
    // Predicated region
    $region10: #{negr_loss.1} parent=1 // pred_check
      _
    $region11: #{negr_loss.1} parent=1 // pred_check_branch
      %33 = sbr.rel (0) target = $region13
    $region12: #{negr_loss.1} parent=1 // pred_region
      %35 = dma.done [#allocation10], 128
    $region13: #{negr_loss.1} parent=1 // pred_fallthru
      _
    // Predicated region
    $region14: #{negr_loss.1} parent=1 // pred_check
      _
    $region15: #{negr_loss.1} parent=1 // pred_check_branch
      %37 = sbr.rel (0) target = $region17
    $region16: #{negr_loss.1} parent=1 // pred_region
      %39 = dma.done [#allocation13], 128
    $region17: #{negr_loss.1} parent=1 // pred_fallthru
      _
    %v40 = vld [vmem:[#allocation9] sm:$0xff]
    %v41 = vld [vmem:[#allocation12] sm:$0xff]
    %p42 = scmp.eq.s32.totalorder 0, 0
    // Predicated region
    $region18: #{negr_loss.1} parent=1 // pred_check
      %p43 = pneg %p42
    $region19: #{negr_loss.1} parent=1 // pred_check_branch
      %45 = sbr.rel (%p43) target = $region21
    $region20: #{negr_loss.1} parent=1 // pred_region
      %vm46 = vcmask 253952
      %47 = vst.msk [vmem:[#allocation7] sm:$0x1] %vm46, %v40
      %48 = vst.msk [vmem:[#allocation8] sm:$0x1] %vm46, %v41
      %vm49 = vcmask 261120
      %50 = vst.msk [vmem:[#allocation2] sm:$0xff] %vm49, 0.0
      %51 = vst.msk [vmem:[#allocation3] sm:$0xff] %vm49, 0.0
      %52 = vst.msk [vmem:[#allocation4] sm:$0xff] %vm49, 0.0
      %53 = vst.msk [vmem:[#allocation5] sm:$0xff] %vm49, 0.0
      %54 = vst.msk [vmem:[#allocation6] sm:$0xff] %vm49, 0.0
    $region21: #{negr_loss.1} parent=1 // pred_fallthru
      _
    %v55 = vld [vmem:[#allocation7] sm:$0x1]
    %v57 = vperm.slane %v55, 0
    %v59 = vsub.f32 %v40, %v57
    %v60 = vld [vmem:[#allocation8] sm:$0x1]
    %v62 = vperm.slane %v60, 0
    %v64 = vsub.f32 %v41, %v62
    %v65 = vld [vmem:[#allocation2] sm:$0xff]
    %v66 = vadd.f32 %v59, 0.0
    %v67 = vadd.f32 %v65, %v66
    %vm68 = vcmask 261120
    %69 = vst.msk [vmem:[#allocation2] sm:$0xff] %vm68, %v67
    %v70 = vld [vmem:[#allocation3] sm:$0xff]
    %v71 = vadd.f32 %v64, 0.0
    %v72 = vadd.f32 %v70, %v71
    %73 = vst.msk [vmem:[#allocation3] sm:$0xff] %vm68, %v72
    %v74 = vld [vmem:[#allocation4] sm:$0xff]
    %v75 = vmul.f32 %v59, %v59
    %v76 = vadd.f32 %v75, 0.0
    %v77 = vadd.f32 %v74, %v76
    %78 = vst.msk [vmem:[#allocation4] sm:$0xff] %vm68, %v77
    %v79 = vld [vmem:[#allocation5] sm:$0xff]
    %v80 = vmul.f32 %v64, %v64
    %v81 = vadd.f32 %v80, 0.0
    %v82 = vadd.f32 %v79, %v81
    %83 = vst.msk [vmem:[#allocation5] sm:$0xff] %vm68, %v82
    %v84 = vld [vmem:[#allocation6] sm:$0xff]
    %v85 = vmul.f32 %v59, %v64
    %v86 = vadd.f32 %v85, 0.0
    %v87 = vadd.f32 %v84, %v86
    %88 = vst.msk [vmem:[#allocation6] sm:$0xff] %vm68, %v87
    // Predicated region
    $region22: #{negr_loss.1} parent=1 // pred_check
      %p89 = pneg %p42
    $region23: #{negr_loss.1} parent=1 // pred_check_branch
      %91 = sbr.rel (%p89) target = $region25
    $region24: #{negr_loss.1} parent=1 // pred_region
      %v92 = vld [vmem:[#allocation2] sm:$0xff]
      %v93 = vsel %vm68, %v92, 0.0
      %v94 = vrot.slane %v93, 4
      %v95 = vadd.f32 %v93, %v94
      %v96 = vrot.slane %v95, 2
      %v97 = vadd.f32 %v95, %v96
      %v98 = vrot.slane %v97, 1
      %v99 = vadd.f32 %v97, %v98
      %v100 = vld [vmem:[#allocation3] sm:$0xff]
      %v101 = vsel %vm68, %v100, 0.0
      %v102 = vrot.slane %v101, 4
      %v103 = vadd.f32 %v101, %v102
      %v104 = vrot.slane %v103, 2
      %v105 = vadd.f32 %v103, %v104
      %v106 = vrot.slane %v105, 1
      %v107 = vadd.f32 %v105, %v106
      %v108 = vld [vmem:[#allocation4] sm:$0xff]
      %v109 = vsel %vm68, %v108, 0.0
      %v110 = vrot.slane %v109, 4
      %v111 = vadd.f32 %v109, %v110
      %v112 = vrot.slane %v111, 2
      %v113 = vadd.f32 %v111, %v112
      %v114 = vrot.slane %v113, 1
      %v115 = vadd.f32 %v113, %v114
      %v116 = vld [vmem:[#allocation5] sm:$0xff]
      %v117 = vsel %vm68, %v116, 0.0
      %v118 = vrot.slane %v117, 4
      %v119 = vadd.f32 %v117, %v118
      %v120 = vrot.slane %v119, 2
      %v121 = vadd.f32 %v119, %v120
      %v122 = vrot.slane %v121, 1
      %v123 = vadd.f32 %v121, %v122
      %v124 = vld [vmem:[#allocation6] sm:$0xff]
      %v125 = vsel %vm68, %v124, 0.0
      %v126 = vrot.slane %v125, 4
      %v127 = vadd.f32 %v125, %v126
      %v128 = vrot.slane %v127, 2
      %v129 = vadd.f32 %v127, %v128
      %v130 = vrot.slane %v129, 1
      %v131 = vadd.f32 %v129, %v130
      %v132 = vmul.f32 %v99, 0.125
      %v133 = vmul.f32 %v107, 0.125
      %v134 = vmul.f32 %v115, 0.125
      %v135 = vmul.f32 %v132, %v132
      %v136 = vsub.f32 %v134, %v135
      %v137 = vmul.f32 %v123, 0.125
      %v138 = vmul.f32 %v133, %v133
      %v139 = vsub.f32 %v137, %v138
      %v140 = vmul.f32 %v131, 0.125
      %v141 = vmul.f32 %v132, %v133
      %v142 = vsub.f32 %v140, %v141
      %v143 = vmul.f32 %v136, %v139
      %v144 = vrsqrt.pop %v143
      %v145 = vmul.f32 %v144, %v143
      %v146 = vmul.f32 %v145, %v144
      %v147 = vmul.f32 0.5, %v146
      %v148 = vsub.f32 1.5, %v147
      %v149 = vmul.f32 %v144, %v148
      %vm150 = vweird.f32 %v143
      %vm151 = vweird.f32 %v144
      %vm152 = vmor %vm150, %vm151
      %v153 = vsel %vm152, %v144, %v149
      %v154 = vmul.f32 %v142, %v153
      %vm155 = vcmask 253952
      %156 = vst.msk [vmem:[#allocation14] sm:$0x1] %vm155, %v154
    $region25: #{negr_loss.1} parent=1 // pred_fallthru
      _
    // Predicated region
    $region26: #{negr_loss.1} parent=1 // pred_check
      _
    $region27: #{negr_loss.1} parent=1 // pred_check_branch
      %158 = sbr.rel (0) target = $region29
    $region28: #{negr_loss.1} parent=1 // pred_region
      %160 = vsyncadd [#allocation11], 0
      %s162 = sshll.u32 [#allocation14], 4
      %s163 = int_to_ptr.vmem [resolvable:$true] %s162
      %s164 = sshll.u32 %s2, 4
      %s165 = int_to_ptr.hbm [resolvable:$true] %s164
      %167 = dma.vmem_to_hbm [thread:$0]  %s163, 16, %s165, [#allocation11]
    $region29: #{negr_loss.1} parent=1 // pred_fallthru
      _
    // Predicated region
    $region30: #{negr_loss.1} parent=1 // pred_check
      _
    $region31: #{negr_loss.1} parent=1 // pred_check_branch
      %169 = sbr.rel (0) target = $region33
    $region32: #{negr_loss.1} parent=1 // pred_region
      %171 = dma.done [#allocation11], 16
    $region33: #{negr_loss.1} parent=1 // pred_fallthru
      _
    %172 = vsyncpa [#allocation10], 1
    %173 = vsyncpa [#allocation13], 1
    %174 = vsyncpa [#allocation11], 1

</llo_original>
